<compile_context>
chip_gen: v6e
topology: v6e:2x2x1
jax: 0.10.0
libtpu: 0.0.40
codegen_flags: <defaults>
</compile_context>

<pallas_src>
import functools

import jax
import jax.numpy as jnp
from jax.experimental import pallas as pl
from jax.experimental.pallas import tpu as pltpu

NEG_BIG = -1e30  # finite "-inf" for padded logit lanes (exp underflows to 0)
OUT_PAD = 128    # lane-dense output width


def dnn_kernel(x_ref, w1_ref, b1_ref, w2_ref, b2_ref, w3_ref, b3_ref, o_ref):
    # fc1 + ReLU: bf16 MXU matmul, f32 accumulate, bias/ReLU in f32.
    h1 = jnp.dot(x_ref[...], w1_ref[...], preferred_element_type=jnp.float32)
    h1 = jnp.maximum(h1 + b1_ref[...], 0.0)

    # fc2 + ReLU
    h2 = jnp.dot(h1.astype(w2_ref.dtype), w2_ref[...],
                 preferred_element_type=jnp.float32)
    h2 = jnp.maximum(h2 + b2_ref[...], 0.0)

    # fc3: output lanes padded to 128; padded lanes carry bias = -1e30.
    logits = jnp.dot(h2.astype(w3_ref.dtype), w3_ref[...],
                     preferred_element_type=jnp.float32)
    logits = logits + b3_ref[...]

    # LogSoftmax over the class (lane) axis, numerically stable.  Padded lanes
    # contribute nothing: they never win the max and exp(-1e30 - m) == 0.
    m = jnp.max(logits, axis=-1, keepdims=True)
    shifted = logits - m
    lse = jnp.log(jnp.sum(jnp.exp(shifted), axis=-1, keepdims=True))
    o_ref[...] = (shifted - lse).astype(o_ref.dtype)


def prepare_params(w1, b1, w2, b2, w3, b3, out_pad=OUT_PAD):
    """One-time prep (do NOT run per forward call): transpose PyTorch-style
    (out, in) weights to (in, out), cast to bf16, pad fc3 to `out_pad` lanes."""
    n_out, h2 = w3.shape
    w1t = jnp.asarray(w1.T, jnp.bfloat16)
    w2t = jnp.asarray(w2.T, jnp.bfloat16)
    w3t = jnp.zeros((h2, out_pad), jnp.bfloat16).at[:, :n_out].set(
        jnp.asarray(w3.T, jnp.bfloat16))
    b1r = jnp.asarray(b1, jnp.float32)[None, :]
    b2r = jnp.asarray(b2, jnp.float32)[None, :]
    b3r = jnp.full((1, out_pad), NEG_BIG, jnp.float32).at[0, :n_out].set(
        jnp.asarray(b3, jnp.float32))
    return (w1t, b1r, w2t, b2r, w3t, b3r), n_out


@functools.partial(jax.jit, static_argnames=("n_out",))
def dnn_forward(x, params, n_out):
    """x: (B, input_size) float32. params: output of prepare_params."""
    w1t, b1r, w2t, b2r, w3t, b3r = params
    B, in_size = x.shape
    out_pad = w3t.shape[1]

    # Batch tile: up to 128 rows per grid step, padded to a multiple of 8 so
    # blocks satisfy the (8, 128) tiling constraint.
    tb = 128 if B >= 128 else 8 * pl.cdiv(B, 8)
    b_pad = tb * pl.cdiv(B, tb)

    xb = x.astype(jnp.bfloat16)
    if b_pad != B:
        xb = jnp.pad(xb, ((0, b_pad - B), (0, 0)))

    # Weights/biases: constant block index -> resident in VMEM across the grid.
    resident = lambda shape: pl.BlockSpec(shape, lambda i: (0, 0))

    out = pl.pallas_call(
        dnn_kernel,
        out_shape=jax.ShapeDtypeStruct((b_pad, out_pad), jnp.float32),
        grid=(b_pad // tb,),
        in_specs=[
            pl.BlockSpec((tb, in_size), lambda i: (i, 0)),   # x: pipelined per tile
            resident(w1t.shape), resident(b1r.shape),
            resident(w2t.shape), resident(b2r.shape),
            resident(w3t.shape), resident(b3r.shape),
        ],
        out_specs=pl.BlockSpec((tb, out_pad), lambda i: (i, 0)),
        compiler_params=pltpu.CompilerParams(
            dimension_semantics=("parallel",)),  # shard batch tiles across TCs
    )(xb, w1t, b1r, w2t, b2r, w3t, b3r)

    return out[:B, :n_out]


def init_linear_params(key, in_features, out_features):
    """Deterministic init mimicking nn.Linear's uniform(-1/sqrt(in), 1/sqrt(in))."""
    kw, kb = jax.random.split(key)
    bound = 1.0 / jnp.sqrt(jnp.float32(in_features))
    w = jax.random.uniform(kw, (out_features, in_features), jnp.float32, -bound, bound)
    b = jax.random.uniform(kb, (out_features,), jnp.float32, -bound, bound)
    return w, b


def reference_forward_f32(x, w1, b1, w2, b2, w3, b3):
    """Pure f32 PyTorch-semantics reference."""
    h1 = jnp.maximum(x @ w1.T + b1, 0.0)
    h2 = jnp.maximum(h1 @ w2.T + b2, 0.0)
    logits = h2 @ w3.T + b3
    return jax.nn.log_softmax(logits, axis=1)


def reference_forward_bf16(x, w1, b1, w2, b2, w3, b3):
    """Reference that emulates the kernel's bf16-input / f32-accumulate matmuls."""
    hp = jax.lax.Precision.HIGHEST
    bf = lambda a: a.astype(jnp.bfloat16).astype(jnp.float32)
    h1 = jnp.maximum(jnp.dot(bf(x), bf(w1.T), precision=hp) + b1, 0.0)
    h2 = jnp.maximum(jnp.dot(bf(h1), bf(w2.T), precision=hp) + b2, 0.0)
    logits = jnp.dot(bf(h2), bf(w3.T), precision=hp) + b3
    return jax.nn.log_softmax(logits, axis=1)


if __name__ == "__main__":
    # Small shapes consistent with the module: flattened 16x16 image,
    # hidden_size=[128, 64], output_size=10 classes.
    batch = 8
    input_size = 16 * 16
    hidden_size = [128, 64]
    output_size = 10

    key = jax.random.PRNGKey(0)
    kx, k1, k2, k3 = jax.random.split(key, 4)

    x = jax.random.normal(kx, (batch, input_size), jnp.float32)
    w1, b1 = init_linear_params(k1, input_size, hidden_size[0])
    w2, b2 = init_linear_params(k2, hidden_size[0], hidden_size[1])
    w3, b3 = init_linear_params(k3, hidden_size[1], output_size)

    params, n_out = prepare_params(w1, b1, w2, b2, w3, b3)

    out = dnn_forward(x, params, n_out)
    out = jax.block_until_ready(out)
    assert out.shape == (batch, output_size)

    # Tight check vs. a reference that matches the kernel's bf16/f32 numerics.
    ref_bf16 = reference_forward_bf16(x, w1, b1, w2, b2, w3, b3)
    assert jnp.allclose(out, ref_bf16, atol=1e-4, rtol=1e-4), "mismatch vs bf16 reference"

    # Loose sanity check vs. the pure-f32 PyTorch-semantics reference.
    ref_f32 = reference_forward_f32(x, w1, b1, w2, b2, w3, b3)
    assert jnp.allclose(out, ref_f32, atol=3e-2, rtol=3e-2), "mismatch vs f32 reference"

    print("KERNEL_OK")
</pallas_src>

<mosaic_0001>
module attributes {stable_mosaic.version = 11 : i64} {
  func.func @dnn_kernel(%arg0: i32, %arg1: memref<8x256xbf16, #tpu.memory_space<vmem>>, %arg2: memref<256x128xbf16, #tpu.memory_space<vmem>>, %arg3: memref<1x128xf32, #tpu.memory_space<vmem>>, %arg4: memref<128x64xbf16, #tpu.memory_space<vmem>>, %arg5: memref<1x64xf32, #tpu.memory_space<vmem>>, %arg6: memref<64x128xbf16, #tpu.memory_space<vmem>>, %arg7: memref<1x128xf32, #tpu.memory_space<vmem>>, %arg8: memref<8x128xf32, #tpu.memory_space<vmem>>) attributes {dimension_semantics = [#tpu.dimension_semantics<parallel>], iteration_bounds = array<i64: 1>, scalar_prefetch = 0 : i64, scratch_operands = 0 : i64, tpu.core_type = #tpu.core_type<tc>, window_params = [{transform_indices = @transform_0, window_bounds = array<i64: 8, 256>}, {pipeline_mode = #tpu.pipeline_mode<synchronous>, transform_indices = @transform_1, window_bounds = array<i64: 256, 128>}, {pipeline_mode = #tpu.pipeline_mode<synchronous>, transform_indices = @transform_2, window_bounds = array<i64: 1, 128>}, {pipeline_mode = #tpu.pipeline_mode<synchronous>, transform_indices = @transform_3, window_bounds = array<i64: 128, 64>}, {pipeline_mode = #tpu.pipeline_mode<synchronous>, transform_indices = @transform_4, window_bounds = array<i64: 1, 64>}, {pipeline_mode = #tpu.pipeline_mode<synchronous>, transform_indices = @transform_5, window_bounds = array<i64: 64, 128>}, {pipeline_mode = #tpu.pipeline_mode<synchronous>, transform_indices = @transform_6, window_bounds = array<i64: 1, 128>}, {transform_indices = @transform_7, window_bounds = array<i64: 8, 128>}]} {
    %c0 = arith.constant 0 : index
    %c0_0 = arith.constant 0 : index
    %0 = vector.load %arg1[%c0, %c0_0] : memref<8x256xbf16, #tpu.memory_space<vmem>>, vector<8x256xbf16>
    %c0_1 = arith.constant 0 : index
    %c0_2 = arith.constant 0 : index
    %1 = vector.load %arg2[%c0_1, %c0_2] : memref<256x128xbf16, #tpu.memory_space<vmem>>, vector<256x128xbf16>
    %cst = arith.constant dense<0.000000e+00> : vector<8x128xf32>
    %2 = tpu.matmul %0, %1, %cst {dimension_numbers = #tpu.dot_dimension_numbers<[1], [0], [0], [1], [0, 0, 1, 1], [], []>} : vector<8x256xbf16>, vector<256x128xbf16>, vector<8x128xf32> -> vector<8x128xf32>
    %c0_3 = arith.constant 0 : index
    %c0_4 = arith.constant 0 : index
    %3 = vector.load %arg3[%c0_3, %c0_4] : memref<1x128xf32, #tpu.memory_space<vmem>>, vector<1x128xf32>
    %4 = vector.broadcast %3 : vector<1x128xf32> to vector<8x128xf32>
    %5 = arith.addf %2, %4 : vector<8x128xf32>
    %cst_5 = arith.constant 0.000000e+00 : f32
    %6 = vector.broadcast %cst_5 : f32 to vector<8x128xf32>
    %7 = arith.maximumf %5, %6 : vector<8x128xf32>
    %8 = arith.truncf %7 : vector<8x128xf32> to vector<8x128xbf16>
    %c0_6 = arith.constant 0 : index
    %c0_7 = arith.constant 0 : index
    %9 = vector.load %arg4[%c0_6, %c0_7] : memref<128x64xbf16, #tpu.memory_space<vmem>>, vector<128x64xbf16>
    %cst_8 = arith.constant dense<0.000000e+00> : vector<8x64xf32>
    %10 = tpu.matmul %8, %9, %cst_8 {dimension_numbers = #tpu.dot_dimension_numbers<[1], [0], [0], [1], [0, 0, 1, 1], [], []>} : vector<8x128xbf16>, vector<128x64xbf16>, vector<8x64xf32> -> vector<8x64xf32>
    %c0_9 = arith.constant 0 : index
    %c0_10 = arith.constant 0 : index
    %11 = vector.load %arg5[%c0_9, %c0_10] : memref<1x64xf32, #tpu.memory_space<vmem>>, vector<1x64xf32>
    %12 = vector.broadcast %11 : vector<1x64xf32> to vector<8x64xf32>
    %13 = arith.addf %10, %12 : vector<8x64xf32>
    %cst_11 = arith.constant 0.000000e+00 : f32
    %14 = vector.broadcast %cst_11 : f32 to vector<8x64xf32>
    %15 = arith.maximumf %13, %14 : vector<8x64xf32>
    %16 = arith.truncf %15 : vector<8x64xf32> to vector<8x64xbf16>
    %c0_12 = arith.constant 0 : index
    %c0_13 = arith.constant 0 : index
    %17 = vector.load %arg6[%c0_12, %c0_13] : memref<64x128xbf16, #tpu.memory_space<vmem>>, vector<64x128xbf16>
    %cst_14 = arith.constant dense<0.000000e+00> : vector<8x128xf32>
    %18 = tpu.matmul %16, %17, %cst_14 {dimension_numbers = #tpu.dot_dimension_numbers<[1], [0], [0], [1], [0, 0, 1, 1], [], []>} : vector<8x64xbf16>, vector<64x128xbf16>, vector<8x128xf32> -> vector<8x128xf32>
    %c0_15 = arith.constant 0 : index
    %c0_16 = arith.constant 0 : index
    %19 = vector.load %arg7[%c0_15, %c0_16] : memref<1x128xf32, #tpu.memory_space<vmem>>, vector<1x128xf32>
    %20 = vector.broadcast %19 : vector<1x128xf32> to vector<8x128xf32>
    %21 = arith.addf %18, %20 : vector<8x128xf32>
    %cst_17 = arith.constant dense<0xFF800000> : vector<8xf32>
    %22 = vector.multi_reduction <maximumf>, %21, %cst_17 [1] : vector<8x128xf32> to vector<8xf32>
    %23 = vector.shape_cast %22 : vector<8xf32> to vector<8x1xf32>
    %24 = vector.broadcast %23 : vector<8x1xf32> to vector<8x128xf32>
    %25 = arith.subf %21, %24 : vector<8x128xf32>
    %26 = math.exp %25 : vector<8x128xf32>
    %cst_18 = arith.constant dense<0.000000e+00> : vector<8xf32>
    %27 = vector.multi_reduction <add>, %26, %cst_18 [1] : vector<8x128xf32> to vector<8xf32>
    %28 = vector.shape_cast %27 : vector<8xf32> to vector<8x1xf32>
    %29 = math.log %28 : vector<8x1xf32>
    %30 = vector.broadcast %29 : vector<8x1xf32> to vector<8x128xf32>
    %31 = arith.subf %25, %30 : vector<8x128xf32>
    %c0_19 = arith.constant 0 : index
    %c0_20 = arith.constant 0 : index
    %32 = vector.load %arg8[%c0_19, %c0_20] : memref<8x128xf32, #tpu.memory_space<vmem>>, vector<8x128xf32>
    tpu.vector_store %arg8[%c0_19, %c0_20], %31 {strides = array<i32>} : memref<8x128xf32, #tpu.memory_space<vmem>>, vector<8x128xf32>,
    return
  }
  func.func @transform_0(%arg0: i32) -> (i32, i32) {
    %c0_i32 = arith.constant 0 : i32
    %c0_i32_0 = arith.constant 0 : i32
    return %arg0, %c0_i32 : i32, i32
  }
  func.func @transform_1(%arg0: i32) -> (i32, i32) {
    %c0_i32 = arith.constant 0 : i32
    %c0_i32_0 = arith.constant 0 : i32
    %c0_i32_1 = arith.constant 0 : i32
    return %c0_i32, %c0_i32_0 : i32, i32
  }
  func.func @transform_2(%arg0: i32) -> (i32, i32) {
    %c0_i32 = arith.constant 0 : i32
    %c0_i32_0 = arith.constant 0 : i32
    %c0_i32_1 = arith.constant 0 : i32
    return %c0_i32, %c0_i32_0 : i32, i32
  }
  func.func @transform_3(%arg0: i32) -> (i32, i32) {
    %c0_i32 = arith.constant 0 : i32
    %c0_i32_0 = arith.constant 0 : i32
    %c0_i32_1 = arith.constant 0 : i32
    return %c0_i32, %c0_i32_0 : i32, i32
  }
  func.func @transform_4(%arg0: i32) -> (i32, i32) {
    %c0_i32 = arith.constant 0 : i32
    %c0_i32_0 = arith.constant 0 : i32
    %c0_i32_1 = arith.constant 0 : i32
    return %c0_i32, %c0_i32_0 : i32, i32
  }
  func.func @transform_5(%arg0: i32) -> (i32, i32) {
    %c0_i32 = arith.constant 0 : i32
    %c0_i32_0 = arith.constant 0 : i32
    %c0_i32_1 = arith.constant 0 : i32
    return %c0_i32, %c0_i32_0 : i32, i32
  }
  func.func @transform_6(%arg0: i32) -> (i32, i32) {
    %c0_i32 = arith.constant 0 : i32
    %c0_i32_0 = arith.constant 0 : i32
    %c0_i32_1 = arith.constant 0 : i32
    return %c0_i32, %c0_i32_0 : i32, i32
  }
  func.func @transform_7(%arg0: i32) -> (i32, i32) {
    %c0_i32 = arith.constant 0 : i32
    %c0_i32_0 = arith.constant 0 : i32
    return %arg0, %c0_i32 : i32, i32
  }
}

</mosaic_0001>

<llo_original>
// kernel: dnn_forward.1
$region0: #{dnn_forward.1}
  #allocation0 [shape = 'u32[]', space=smem, size = 0x4, offset = 0x4, fixed_abs, tag = 'smem constant byte address 0x4 - core index']
  #allocation1 [shape = 'u32[144,128]{1,0:T(1,128)}', space=vmem, size = 0x12000, scoped, tag = 'internal scratch']
  %s0 = inlined_call_operand.vmem [shape: bf16[8,256], index: 0, kind: input, shape index: {}]
  %s1 = inlined_call_operand.hbm [shape: bf16[256,128], index: 1, kind: input, shape index: {}]
  %s2 = inlined_call_operand.vmem [shape: f32[1,128], index: 2, kind: input, shape index: {}]
  %s3 = inlined_call_operand.vmem [shape: bf16[128,64], index: 3, kind: input, shape index: {}]
  %s4 = inlined_call_operand.vmem [shape: f32[1,64], index: 4, kind: input, shape index: {}]
  %s5 = inlined_call_operand.vmem [shape: bf16[64,128], index: 5, kind: input, shape index: {}]
  %s6 = inlined_call_operand.vmem [shape: f32[1,128], index: 6, kind: input, shape index: {}]
  %s7 = inlined_call_operand.hbm [shape: f32[8,128], index: 7, kind: output, shape index: {}]
  %s8 = sld [smem:[#allocation0]]
  $region42: #{dnn_forward.1} parent=0
    _
  %s10 = ssub.s32 1, %s8
  %s11 = scalar_select 0, %s10, %s8
  $region1: #{dnn_forward.1} parent=0
    #allocation2 [shape = 'u8[65536]{0}', space=vmem, size = 0x10000, scoped, tag = 'input window, operand 1, single buffered']
    #allocation3 [shape = 's32[1]{0}', space=sflag, size = 0x4, scoped, tag = 'scoped memory for dnn_forward.1']
    #allocation4 [shape = 's32[1]{0}', space=sflag, size = 0x4, scoped, tag = 'scoped memory for dnn_forward.1']
    #allocation5 [shape = 'u8[4096]{0}', space=vmem, size = 0x1000, scoped, tag = 'output window, operand 0, single buffered']
    %12 = vsyncpa [#allocation3], 0
    %13 = vsyncpa [#allocation4], 0
    // Predicated region
    $region2: #{dnn_forward.1} parent=1 // pred_check
      _
    $region3: #{dnn_forward.1} parent=1 // pred_check_branch
      %15 = sbr.rel (0) target = $region5
    $region4: #{dnn_forward.1} parent=1 // pred_region
      _
    $region5: #{dnn_forward.1} parent=1 // pred_fallthru
      _
    // Predicated region
    $region6: #{dnn_forward.1} parent=1 // pred_check
      _
    $region7: #{dnn_forward.1} parent=1 // pred_check_branch
      %17 = sbr.rel (0) target = $region9
    $region8: #{dnn_forward.1} parent=1 // pred_region
      %s19 = ssub.s32 2048, 2048
      %20 = vsyncadd [#allocation3], %s19
      %s21 = sshll.u32 [#allocation2], 4
      %s22 = int_to_ptr.vmem [resolvable:$true] %s21
      %27 = dma.hbm_to_vmem [thread:$0]  %s1, 2048, %s22, [#allocation3], 64, 64, 4
    $region9: #{dnn_forward.1} parent=1 // pred_fallthru
      _
    // Predicated region
    $region10: #{dnn_forward.1} parent=1 // pred_check
      _
    $region11: #{dnn_forward.1} parent=1 // pred_check_branch
      %29 = sbr.rel (0) target = $region13
    $region12: #{dnn_forward.1} parent=1 // pred_region
      _
    $region13: #{dnn_forward.1} parent=1 // pred_fallthru
      _
    // Predicated region
    $region14: #{dnn_forward.1} parent=1 // pred_check
      _
    $region15: #{dnn_forward.1} parent=1 // pred_check_branch
      %31 = sbr.rel (0) target = $region17
    $region16: #{dnn_forward.1} parent=1 // pred_region
      _
    $region17: #{dnn_forward.1} parent=1 // pred_fallthru
      _
    // Predicated region
    $region18: #{dnn_forward.1} parent=1 // pred_check
      _
    $region19: #{dnn_forward.1} parent=1 // pred_check_branch
      %33 = sbr.rel (0) target = $region21
    $region20: #{dnn_forward.1} parent=1 // pred_region
      _
    $region21: #{dnn_forward.1} parent=1 // pred_fallthru
      _
    // Predicated region
    $region22: #{dnn_forward.1} parent=1 // pred_check
      _
    $region23: #{dnn_forward.1} parent=1 // pred_check_branch
      %35 = sbr.rel (0) target = $region25
    $region24: #{dnn_forward.1} parent=1 // pred_region
      _
    $region25: #{dnn_forward.1} parent=1 // pred_fallthru
      _
    // Predicated region
    $region26: #{dnn_forward.1} parent=1 // pred_check
      _
    $region27: #{dnn_forward.1} parent=1 // pred_check_branch
      %37 = sbr.rel (0) target = $region29
    $region28: #{dnn_forward.1} parent=1 // pred_region
      _
    $region29: #{dnn_forward.1} parent=1 // pred_fallthru
      _
    // Predicated region
    $region30: #{dnn_forward.1} parent=1 // pred_check
      _
    $region31: #{dnn_forward.1} parent=1 // pred_check_branch
      %39 = sbr.rel (0) target = $region33
    $region32: #{dnn_forward.1} parent=1 // pred_region
      %40 = dma.done [#allocation3], 2048
    $region33: #{dnn_forward.1} parent=1 // pred_fallthru
      _
    %v42 = vld [vmem:[%s0] sm:$0xff]
    %v43 = vld [vmem:[#allocation2] sm:$0xf]
    %v44 = vld [vmem:[#allocation2 + $0x4] sm:$0xf]
    %v45 = vld [vmem:[#allocation2 + $0x8] sm:$0xf]
    %v46 = vld [vmem:[#allocation2 + $0xc] sm:$0xf]
    %v47 = vld [vmem:[#allocation2 + $0x10] sm:$0xf]
    %v48 = vld [vmem:[#allocation2 + $0x14] sm:$0xf]
    %v49 = vld [vmem:[#allocation2 + $0x18] sm:$0xf]
    %v50 = vld [vmem:[#allocation2 + $0x1c] sm:$0xf]
    %v51 = vld [vmem:[#allocation2 + $0x20] sm:$0xf]
    %v52 = vld [vmem:[#allocation2 + $0x24] sm:$0xf]
    %v53 = vld [vmem:[#allocation2 + $0x28] sm:$0xf]
    %v54 = vld [vmem:[#allocation2 + $0x2c] sm:$0xf]
    %v55 = vld [vmem:[#allocation2 + $0x30] sm:$0xf]
    %v56 = vld [vmem:[#allocation2 + $0x34] sm:$0xf]
    %v57 = vld [vmem:[#allocation2 + $0x38] sm:$0xf]
    %v58 = vld [vmem:[#allocation2 + $0x3c] sm:$0xf]
    %v59 = vld [vmem:[#allocation2 + $0x40] sm:$0xf]
    %v60 = vld [vmem:[#allocation2 + $0x44] sm:$0xf]
    %v61 = vld [vmem:[#allocation2 + $0x48] sm:$0xf]
    %v62 = vld [vmem:[#allocation2 + $0x4c] sm:$0xf]
    %v63 = vld [vmem:[#allocation2 + $0x50] sm:$0xf]
    %v64 = vld [vmem:[#allocation2 + $0x54] sm:$0xf]
    %v65 = vld [vmem:[#allocation2 + $0x58] sm:$0xf]
    %v66 = vld [vmem:[#allocation2 + $0x5c] sm:$0xf]
    %v67 = vld [vmem:[#allocation2 + $0x60] sm:$0xf]
    %v68 = vld [vmem:[#allocation2 + $0x64] sm:$0xf]
    %v69 = vld [vmem:[#allocation2 + $0x68] sm:$0xf]
    %v70 = vld [vmem:[#allocation2 + $0x6c] sm:$0xf]
    %v71 = vld [vmem:[#allocation2 + $0x70] sm:$0xf]
    %v72 = vld [vmem:[#allocation2 + $0x74] sm:$0xf]
    %v73 = vld [vmem:[#allocation2 + $0x78] sm:$0xf]
    %v74 = vld [vmem:[#allocation2 + $0x7c] sm:$0xf]
    %v75 = vld [vmem:[%s2] sm:$0x1]
    %v77 = vlaneseq
    %v78 = vshrl.u32 %v77, 7
    %v79 = vsub.s32 0, %v78
    %v80 = vrot.slane %v75, %v79
    %v83 = vunpack.c.l.b16 %v42
    %v84 = vunpack.c.h.b16 %v42
    %v85 = vpack.c.b16 %v83, %v83
    %v86 = vpack.c.b16 %v84, %v84
    %v121 = vunpack.c.l.b16 %v43
    %v122 = vunpack.c.l.b16 %v44
    %v123 = vunpack.c.l.b16 %v45
    %v124 = vunpack.c.l.b16 %v46
    %v125 = vunpack.c.l.b16 %v47
    %v126 = vunpack.c.l.b16 %v48
    %v127 = vunpack.c.l.b16 %v49
    %v128 = vunpack.c.l.b16 %v50
    %v129 = vunpack.c.l.b16 %v51
    %v130 = vunpack.c.l.b16 %v52
    %v131 = vunpack.c.l.b16 %v53
    %v132 = vunpack.c.l.b16 %v54
    %v133 = vunpack.c.l.b16 %v55
    %v134 = vunpack.c.l.b16 %v56
    %v135 = vunpack.c.l.b16 %v57
    %v136 = vunpack.c.l.b16 %v58
    %v137 = vunpack.c.l.b16 %v59
    %v138 = vunpack.c.l.b16 %v60
    %v139 = vunpack.c.l.b16 %v61
    %v140 = vunpack.c.l.b16 %v62
    %v141 = vunpack.c.l.b16 %v63
    %v142 = vunpack.c.l.b16 %v64
    %v143 = vunpack.c.l.b16 %v65
    %v144 = vunpack.c.l.b16 %v66
    %v145 = vunpack.c.l.b16 %v67
    %v146 = vunpack.c.l.b16 %v68
    %v147 = vunpack.c.l.b16 %v69
    %v148 = vunpack.c.l.b16 %v70
    %v149 = vunpack.c.l.b16 %v71
    %v150 = vunpack.c.l.b16 %v72
    %v151 = vunpack.c.l.b16 %v73
    %v152 = vunpack.c.l.b16 %v74
    %v153 = vpack.c.b16 %v122, %v121
    %v154 = vpack.c.b16 %v124, %v123
    %v155 = vpack.c.b16 %v126, %v125
    %v156 = vpack.c.b16 %v128, %v127
    %v157 = vpack.c.b16 %v130, %v129
    %v158 = vpack.c.b16 %v132, %v131
    %v159 = vpack.c.b16 %v134, %v133
    %v160 = vpack.c.b16 %v136, %v135
    %v161 = vpack.c.b16 %v138, %v137
    %v162 = vpack.c.b16 %v140, %v139
    %v163 = vpack.c.b16 %v142, %v141
    %v164 = vpack.c.b16 %v144, %v143
    %v165 = vpack.c.b16 %v146, %v145
    %v166 = vpack.c.b16 %v148, %v147
    %v167 = vpack.c.b16 %v150, %v149
    %v168 = vpack.c.b16 %v152, %v151
    %185 = vmatprep.subr.bf16.mxu0 0
    %186 = vmatpush1.bf16.msra.mxu0 %v160
    %187 = vmatprep.subr.bf16.mxu0 0
    %188 = vmatpush1.bf16.msra.mxu0 %v159
    %189 = vmatprep.subr.bf16.mxu0 0
    %190 = vmatpush1.bf16.msra.mxu0 %v158
    %191 = vmatprep.subr.bf16.mxu0 0
    %192 = vmatpush1.bf16.msra.mxu0 %v157
    %193 = vmatprep.subr.bf16.mxu0 0
    %194 = vmatpush1.bf16.msra.mxu0 %v156
    %195 = vmatprep.subr.bf16.mxu0 0
    %196 = vmatpush1.bf16.msra.mxu0 %v155
    %197 = vmatprep.subr.bf16.mxu0 0
    %198 = vmatpush1.bf16.msra.mxu0 %v154
    %199 = vmatprep.subr.bf16.mxu0 0
    %200 = vmatpush1.bf16.msra.mxu0 %v153
    %201 = vmatprep.subr.bf16.mxu0 0
    %202 = vmatpush2.bf16.msra.mxu0 %v168
    %203 = vmatprep.subr.bf16.mxu0 0
    %204 = vmatpush2.bf16.msra.mxu0 %v167
    %205 = vmatprep.subr.bf16.mxu0 0
    %206 = vmatpush2.bf16.msra.mxu0 %v166
    %207 = vmatprep.subr.bf16.mxu0 0
    %208 = vmatpush2.bf16.msra.mxu0 %v165
    %209 = vmatprep.subr.bf16.mxu0 0
    %210 = vmatpush2.bf16.msra.mxu0 %v164
    %211 = vmatprep.subr.bf16.mxu0 0
    %212 = vmatpush2.bf16.msra.mxu0 %v163
    %213 = vmatprep.subr.bf16.mxu0 0
    %214 = vmatpush2.bf16.msra.mxu0 %v162
    %215 = vmatprep.subr.bf16.mxu0 0
    %216 = vmatpush2.bf16.msra.mxu0 %v161
    %217 = vmatprep.mubr.bf16.mxu0 %v86
    %218 = vmatmul.mubr.bf16.gmra.mxu0 %v85
    %v219 = vpop.f32.mrf.mxu0
    %v220 = vadd.f32 %v80, %v219
    %v221 = vpop.f32.mrf.mxu0
    %v222 = vpop.f32.mrf.mxu0
    %v223 = vpop.f32.mrf.mxu0
    %224 = vdwg.mxu0
    %v225 = vmax.f32 %v220, 0.0
    %v226 = vpack.c.bf16 %v225, %v225
    %v227 = vld [vmem:[%s3] sm:$0xf]
    %v228 = vld [vmem:[%s3 + $0x4] sm:$0xf]
    %v229 = vld [vmem:[%s3 + $0x8] sm:$0xf]
    %v230 = vld [vmem:[%s3 + $0xc] sm:$0xf]
    %v231 = vld [vmem:[%s3 + $0x10] sm:$0xf]
    %v232 = vld [vmem:[%s3 + $0x14] sm:$0xf]
    %v233 = vld [vmem:[%s3 + $0x18] sm:$0xf]
    %v234 = vld [vmem:[%s3 + $0x1c] sm:$0xf]
    %v235 = vld [vmem:[%s3 + $0x20] sm:$0xf]
    %v236 = vld [vmem:[%s3 + $0x24] sm:$0xf]
    %v237 = vld [vmem:[%s3 + $0x28] sm:$0xf]
    %v238 = vld [vmem:[%s3 + $0x2c] sm:$0xf]
    %v239 = vld [vmem:[%s3 + $0x30] sm:$0xf]
    %v240 = vld [vmem:[%s3 + $0x34] sm:$0xf]
    %v241 = vld [vmem:[%s3 + $0x38] sm:$0xf]
    %v242 = vld [vmem:[%s3 + $0x3c] sm:$0xf]
    %v243 = vld [vmem:[%s4] sm:$0x1]
    %v245 = vlaneseq
    %v246 = vshrl.u32 %v245, 7
    %v247 = vsub.s32 0, %v246
    %v248 = vrot.slane %v243, %v247
    %v266 = vunpack.c.l.b16 %v227
    %v267 = vunpack.c.l.b16 %v228
    %v268 = vunpack.c.l.b16 %v229
    %v269 = vunpack.c.l.b16 %v230
    %v270 = vunpack.c.l.b16 %v231
    %v271 = vunpack.c.l.b16 %v232
    %v272 = vunpack.c.l.b16 %v233
    %v273 = vunpack.c.l.b16 %v234
    %v274 = vunpack.c.l.b16 %v235
    %v275 = vunpack.c.l.b16 %v236
    %v276 = vunpack.c.l.b16 %v237
    %v277 = vunpack.c.l.b16 %v238
    %v278 = vunpack.c.l.b16 %v239
    %v279 = vunpack.c.l.b16 %v240
    %v280 = vunpack.c.l.b16 %v241
    %v281 = vunpack.c.l.b16 %v242
    %v282 = vpack.c.b16 %v267, %v266
    %v283 = vpack.c.b16 %v269, %v268
    %v284 = vpack.c.b16 %v271, %v270
    %v285 = vpack.c.b16 %v273, %v272
    %v286 = vpack.c.b16 %v275, %v274
    %v287 = vpack.c.b16 %v277, %v276
    %v288 = vpack.c.b16 %v279, %v278
    %v289 = vpack.c.b16 %v281, %v280
    %298 = vmatprep.subr.bf16.mxu0 0
    %299 = vmatpush1.bf16.msra.mxu0 %v289
    %300 = vmatprep.subr.bf16.mxu0 0
    %301 = vmatpush1.bf16.msra.mxu0 %v288
    %302 = vmatprep.subr.bf16.mxu0 0
    %303 = vmatpush1.bf16.msra.mxu0 %v287
    %304 = vmatprep.subr.bf16.mxu0 0
    %305 = vmatpush1.bf16.msra.mxu0 %v286
    %306 = vmatprep.subr.bf16.mxu0 0
    %307 = vmatpush1.bf16.msra.mxu0 %v285
    %308 = vmatprep.subr.bf16.mxu0 0
    %309 = vmatpush1.bf16.msra.mxu0 %v284
    %310 = vmatprep.subr.bf16.mxu0 0
    %311 = vmatpush1.bf16.msra.mxu0 %v283
    %312 = vmatprep.subr.bf16.mxu0 0
    %313 = vmatpush1.bf16.msra.mxu0 %v282
    %314 = vmatprep.subr.bf16.mxu0 0
    %315 = vmatpush2.bf16.msra.mxu0 0
    %316 = vmatprep.subr.bf16.mxu0 0
    %317 = vmatpush2.bf16.msra.mxu0 0
    %318 = vmatprep.subr.bf16.mxu0 0
    %319 = vmatpush2.bf16.msra.mxu0 0
    %320 = vmatprep.subr.bf16.mxu0 0
    %321 = vmatpush2.bf16.msra.mxu0 0
    %322 = vmatprep.subr.bf16.mxu0 0
    %323 = vmatpush2.bf16.msra.mxu0 0
    %324 = vmatprep.subr.bf16.mxu0 0
    %325 = vmatpush2.bf16.msra.mxu0 0
    %326 = vmatprep.subr.bf16.mxu0 0
    %327 = vmatpush2.bf16.msra.mxu0 0
    %328 = vmatprep.subr.bf16.mxu0 0
    %329 = vmatpush2.bf16.msra.mxu0 0
    %330 = vmatprep.mubr.bf16.mxu0 0
    %331 = vmatmul.mubr.bf16.gmra.mxu0 %v226
    %v332 = vpop.f32.mrf.mxu0
    %v333 = vadd.f32 %v248, %v332
    %v334 = vpop.f32.mrf.mxu0
    %v335 = vpop.f32.mrf.mxu0
    %v336 = vpop.f32.mrf.mxu0
    %337 = vdwg.mxu0
    %v338 = vmax.f32 %v333, 0.0
    %v339 = vpack.c.bf16 %v338, %v338
    %v340 = vld [vmem:[%s5] sm:$0xf]
    %v341 = vld [vmem:[%s5 + $0x4] sm:$0xf]
    %v342 = vld [vmem:[%s5 + $0x8] sm:$0xf]
    %v343 = vld [vmem:[%s5 + $0xc] sm:$0xf]
    %v344 = vld [vmem:[%s5 + $0x10] sm:$0xf]
    %v345 = vld [vmem:[%s5 + $0x14] sm:$0xf]
    %v346 = vld [vmem:[%s5 + $0x18] sm:$0xf]
    %v347 = vld [vmem:[%s5 + $0x1c] sm:$0xf]
    %v348 = vld [vmem:[%s6] sm:$0x1]
    %v350 = vlaneseq
    %v351 = vshrl.u32 %v350, 7
    %v352 = vsub.s32 0, %v351
    %v353 = vrot.slane %v348, %v352
    %v363 = vunpack.c.l.b16 %v340
    %v364 = vunpack.c.l.b16 %v341
    %v365 = vunpack.c.l.b16 %v342
    %v366 = vunpack.c.l.b16 %v343
    %v367 = vunpack.c.l.b16 %v344
    %v368 = vunpack.c.l.b16 %v345
    %v369 = vunpack.c.l.b16 %v346
    %v370 = vunpack.c.l.b16 %v347
    %v371 = vpack.c.b16 %v364, %v363
    %v372 = vpack.c.b16 %v366, %v365
    %v373 = vpack.c.b16 %v368, %v367
    %v374 = vpack.c.b16 %v370, %v369
    %vm379 = vcmask 523264
    %v381 = vsel %vm379, %v339, 0
    %383 = vmatprep.subr.bf16.mxu0 0
    %384 = vmatpush1.bf16.msra.mxu0 0
    %385 = vmatprep.subr.bf16.mxu0 0
    %386 = vmatpush1.bf16.msra.mxu0 0
    %387 = vmatprep.subr.bf16.mxu0 0
    %388 = vmatpush1.bf16.msra.mxu0 0
    %389 = vmatprep.subr.bf16.mxu0 0
    %390 = vmatpush1.bf16.msra.mxu0 0
    %391 = vmatprep.subr.bf16.mxu0 0
    %392 = vmatpush1.bf16.msra.mxu0 %v374
    %393 = vmatprep.subr.bf16.mxu0 0
    %394 = vmatpush1.bf16.msra.mxu0 %v373
    %395 = vmatprep.subr.bf16.mxu0 0
    %396 = vmatpush1.bf16.msra.mxu0 %v372
    %397 = vmatprep.subr.bf16.mxu0 0
    %398 = vmatpush1.bf16.msra.mxu0 %v371
    %399 = vmatprep.subr.bf16.mxu0 0
    %400 = vmatpush2.bf16.msra.mxu0 0
    %401 = vmatprep.subr.bf16.mxu0 0
    %402 = vmatpush2.bf16.msra.mxu0 0
    %403 = vmatprep.subr.bf16.mxu0 0
    %404 = vmatpush2.bf16.msra.mxu0 0
    %405 = vmatprep.subr.bf16.mxu0 0
    %406 = vmatpush2.bf16.msra.mxu0 0
    %407 = vmatprep.subr.bf16.mxu0 0
    %408 = vmatpush2.bf16.msra.mxu0 0
    %409 = vmatprep.subr.bf16.mxu0 0
    %410 = vmatpush2.bf16.msra.mxu0 0
    %411 = vmatprep.subr.bf16.mxu0 0
    %412 = vmatpush2.bf16.msra.mxu0 0
    %413 = vmatprep.subr.bf16.mxu0 0
    %414 = vmatpush2.bf16.msra.mxu0 0
    %415 = vmatprep.mubr.bf16.mxu0 0
    %416 = vmatmul.mubr.bf16.gmra.mxu0 %v381
    %v417 = vpop.f32.mrf.mxu0
    %v418 = vadd.f32 %v353, %v417
    %v419 = vpop.f32.mrf.mxu0
    %v420 = vpop.f32.mrf.mxu0
    %v421 = vpop.f32.mrf.mxu0
    %422 = vdwg.mxu0
    %423 = vmax.xlane.f32.xlu0 %v418
    %v424 = vpop.xlane.xlu0 %423
    %v425 = vsub.f32 %v418, %v424
    %v426 = vmul.f32 %v425, 1.442695
    %v427 = vpow.pop %v426
    %428 = vadd.xlane.f32.xlu0 %v427
    %v429 = vpop.xlane.xlu0 %428
    %v430 = vlog2.pop %v429
    %v431 = vmul.f32 %v430, 0.6931472
    %v432 = vsub.f32 %v425, %v431
    %433 = vst [vmem:[#allocation5] sm:$0xff] %v432
    // Predicated region
    $region34: #{dnn_forward.1} parent=1 // pred_check
      _
    $region35: #{dnn_forward.1} parent=1 // pred_check_branch
      %435 = sbr.rel (0) target = $region37
    $region36: #{dnn_forward.1} parent=1 // pred_region
      %s437 = ssub.s32 128, 128
      %438 = vsyncadd [#allocation4], %s437
      %s440 = sshll.u32 [#allocation5], 4
      %s441 = int_to_ptr.vmem [resolvable:$true] %s440
      %443 = dma.vmem_to_hbm [thread:$0]  %s441, 128, %s7, [#allocation4]
    $region37: #{dnn_forward.1} parent=1 // pred_fallthru
      _
    // Predicated region
    $region38: #{dnn_forward.1} parent=1 // pred_check
      _
    $region39: #{dnn_forward.1} parent=1 // pred_check_branch
      %445 = sbr.rel (0) target = $region41
    $region40: #{dnn_forward.1} parent=1 // pred_region
      %446 = dma.done [#allocation4], 128
    $region41: #{dnn_forward.1} parent=1 // pred_fallthru
      _
    %447 = vsyncpa [#allocation3], 1
    %448 = vsyncpa [#allocation4], 1

</llo_original>
